<compile_context>
chip_gen: v7x
topology: tpu7x:2x2x1
jax: 0.10.0
libtpu: 0.0.40
codegen_flags: <defaults>
</compile_context>

<pallas_src>
import functools

import jax
import jax.numpy as jnp
from jax.experimental import pallas as pl
from jax.experimental.pallas import tpu as pltpu  # noqa: F401  (TPU backend)


def _critic_kernel(sa_ref, hx_ref, w_ref, q_ref, hx_out_ref, *, SA_pad, H, B):
    H2, H3, H4 = 2 * H, 3 * H, 4 * H
    o_gru = SA_pad            # W_gru rows start (multiple of 8)
    o_w2 = o_gru + H2         # W2 rows start
    o_tail = o_w2 + H         # 4 tail rows: wq, b1, b_gru, [b2 | bq]

    f32 = jnp.float32
    mm_dtype = w_ref.dtype    # f32 or bf16 (matmul-operand dtype)

    # --- parameters: direct ref slices, static 8-aligned starts ------------
    w1 = w_ref[0:o_gru, 0:H]                                   # (SA_pad, H)
    w_gru = w_ref[o_gru:o_w2, :]                               # (2H, 4H)
    w2 = w_ref[o_w2:o_tail, 0:H]                               # (H, H)
    wq = w_ref[o_tail + 0:o_tail + 1, 0:H].astype(f32)         # (1, H)
    b1 = w_ref[o_tail + 1:o_tail + 2, 0:H].astype(f32)         # (1, H)
    b_gru = w_ref[o_tail + 2:o_tail + 3, :].astype(f32)        # (1, 4H)
    b2 = w_ref[o_tail + 3:o_tail + 4, 0:H].astype(f32)         # (1, H)
    bq = w_ref[o_tail + 3:o_tail + 4, H:H + 1].astype(f32)     # (1, 1)

    sa = sa_ref[...]                                           # (B, SA_pad) f32
    hx_row = hx_ref[...].astype(f32)                           # (1, H)

    # --- fc1 + ReLU (concat done in wrapper -> one aligned MXU matmul) ------
    x = jnp.dot(sa.astype(mm_dtype), w1, preferred_element_type=f32) + b1
    x = jnp.maximum(x, 0.0)                                    # (B, H)

    # --- GRUCell: one fused (B, 2H) @ (2H, 4H) gate matmul ------------------
    # column groups of g: [r_pre | z_pre | n_ih | n_hh], biases pre-packed as
    # [b_ih_r+b_hh_r | b_ih_z+b_hh_z | b_ih_n | b_hh_n].
    hx_b = jnp.broadcast_to(hx_row, (B, H))
    xh = jnp.concatenate([x, hx_b], axis=-1)                   # (B, 2H)
    g = jnp.dot(xh.astype(mm_dtype), w_gru, preferred_element_type=f32) + b_gru

    r = jax.nn.sigmoid(g[:, 0:H])
    z = jax.nn.sigmoid(g[:, H:H2])
    n = jnp.tanh(g[:, H2:H3] + r * g[:, H3:H4])
    hx_new = (1.0 - z) * n + z * hx_row                        # (B, H)

    # --- fc2 + ReLU ----------------------------------------------------------
    y = jnp.dot(hx_new.astype(mm_dtype), w2, preferred_element_type=f32) + b2
    y = jnp.maximum(y, 0.0)

    # --- q_head: VPU multiply + XLU lane reduce (skip an N=1 MXU matmul) ----
    q = jnp.sum(y * wq, axis=-1, keepdims=True) + bq           # (B, 1)

    q_ref[...] = q
    hx_out_ref[...] = hx_new


def critic_forward(state, action, hx, w_pack, *, state_dim, action_dim,
                   hidden_dim):
    """Fused Critic forward. Returns (q_value (B,1), hx_updated (B,H))."""
    B = state.shape[0]
    H = hidden_dim
    SA = state_dim + action_dim
    SA_pad = ((SA + 7) // 8) * 8

    # torch.cat([state, action]) done here (layout plumbing), zero-padded to a
    # sublane-aligned feature count so the kernel's fc1 matmul is unsplit.
    sa = jnp.concatenate([state, action], axis=1).astype(jnp.float32)
    if SA_pad != SA:
        sa = jnp.pad(sa, ((0, 0), (0, SA_pad - SA)))

    kernel = functools.partial(_critic_kernel, SA_pad=SA_pad, H=H, B=B)

    def full_spec(a):
        nd = a.ndim
        return pl.BlockSpec(a.shape, lambda: (0,) * nd)

    inputs = (sa, hx.astype(jnp.float32), w_pack)

    q, hx_updated = pl.pallas_call(
        kernel,
        out_shape=(jax.ShapeDtypeStruct((B, 1), jnp.float32),
                   jax.ShapeDtypeStruct((B, H), jnp.float32)),
        grid=(),
        in_specs=[full_spec(a) for a in inputs],
        out_specs=(pl.BlockSpec((B, 1), lambda: (0, 0)),
                   pl.BlockSpec((B, H), lambda: (0, 0))),
    )(*inputs)
    return q, hx_updated


def init_params(key, state_dim, action_dim, hidden_dim):
    """Deterministic synthetic parameters (logical layout, un-packed)."""
    ks = jax.random.split(key, 10)
    H = hidden_dim
    in1 = state_dim + action_dim

    def mat(k, shape, scale):
        return (scale * jax.random.normal(k, shape)).astype(jnp.float32)

    s1 = 1.0 / jnp.sqrt(in1)
    sh = 1.0 / jnp.sqrt(H)
    return {
        # fc1: torch weight (H, in1) stored transposed as (in1, H)
        "w1": mat(ks[0], (in1, H), s1), "b1": mat(ks[1], (1, H), s1),
        # GRUCell: weight_ih / weight_hh stored transposed & gate-concatenated
        # along columns as (H, 3H) in PyTorch gate order [r | z | n]
        "w_ih": mat(ks[2], (H, 3 * H), sh), "b_ih": mat(ks[3], (1, 3 * H), sh),
        "w_hh": mat(ks[4], (H, 3 * H), sh), "b_hh": mat(ks[5], (1, 3 * H), sh),
        # fc2
        "w2": mat(ks[6], (H, H), sh), "b2": mat(ks[7], (1, H), sh),
        # q_head: weight stored as a (1, H) row, scalar bias
        "wq": mat(ks[8], (1, H), sh), "bq": mat(ks[9], (1, 1), sh),
    }


def pack_params(p, state_dim, action_dim, hidden_dim, dtype=jnp.float32):
    """Pack all weights/biases into one (R, 4H) slab (single DMA).

    Row layout (all block starts 8-aligned):
      [0, SA_pad)            W1          (SA rows real, zero-padded)
      [SA_pad, SA_pad+2H)    W_gru       columns [r | z | n_ih | n_hh],
                                         rows    [ih part ; hh part]
      [.., +H)               W2
      tail row 0             wq
      tail row 1             b1
      tail row 2             b_gru = [b_ih_r+b_hh_r | b_ih_z+b_hh_z | b_ih_n | b_hh_n]
      tail row 3             [b2 | bq]
    dtype=jnp.bfloat16 halves the slab DMA and feeds the MXU bf16 operands
    (use a looser tolerance; elementwise math stays f32 in the kernel).
    """
    H = hidden_dim
    H2, H4 = 2 * H, 4 * H
    SA = state_dim + action_dim
    SA_pad = ((SA + 7) // 8) * 8
    assert H % 8 == 0, "hidden_dim must be a multiple of 8"

    def padc(a):  # pad columns up to 4H
        return jnp.pad(a, ((0, 0), (0, H4 - a.shape[1])))

    w1 = padc(jnp.pad(p["w1"], ((0, SA_pad - SA), (0, 0))))       # (SA_pad, 4H)

    zeros_hh = jnp.zeros((H, H), jnp.float32)
    w_gru_ih = jnp.concatenate(
        [p["w_ih"][:, :H2], p["w_ih"][:, H2:], zeros_hh], axis=1)  # (H, 4H)
    w_gru_hh = jnp.concatenate(
        [p["w_hh"][:, :H2], zeros_hh, p["w_hh"][:, H2:]], axis=1)  # (H, 4H)
    w_gru = jnp.concatenate([w_gru_ih, w_gru_hh], axis=0)          # (2H, 4H)

    w2 = padc(p["w2"])                                             # (H, 4H)

    b_gru = jnp.concatenate(
        [p["b_ih"][:, :H2] + p["b_hh"][:, :H2],                    # r, z folded
         p["b_ih"][:, H2:], p["b_hh"][:, H2:]], axis=1)            # (1, 4H)
    b2_bq = padc(jnp.concatenate([p["b2"], p["bq"]], axis=1))      # (1, 4H)

    slab = jnp.concatenate(
        [w1, w_gru, w2, padc(p["wq"]), padc(p["b1"]), b_gru, b2_bq], axis=0)
    return slab.astype(dtype)


def critic_forward_ref(state, action, hx, p):
    """Pure-JAX reference (mirrors the torch module exactly)."""
    B = state.shape[0]
    H = p["w2"].shape[0]
    hx_b = jnp.broadcast_to(hx, (B, H))
    x = jnp.concatenate([state, action], axis=1)
    x = jax.nn.relu(x @ p["w1"] + p["b1"])
    gi = x @ p["w_ih"] + p["b_ih"]
    gh = hx_b @ p["w_hh"] + p["b_hh"]
    r = jax.nn.sigmoid(gi[:, :H] + gh[:, :H])
    z = jax.nn.sigmoid(gi[:, H:2 * H] + gh[:, H:2 * H])
    n = jnp.tanh(gi[:, 2 * H:] + r * gh[:, 2 * H:])
    hx_new = (1.0 - z) * n + z * hx_b
    y = jax.nn.relu(hx_new @ p["w2"] + p["b2"])
    q = y @ p["wq"].T + p["bq"]
    return q, hx_new


if __name__ == "__main__":
    state_dim, action_dim, hidden_dim, batch = 12, 4, 32, 4

    key = jax.random.PRNGKey(0)
    k_state, k_action, k_hx, k_params = jax.random.split(key, 4)

    state = jax.random.normal(k_state, (batch, state_dim), dtype=jnp.float32)
    action = jax.random.normal(k_action, (batch, action_dim), dtype=jnp.float32)
    hx = jax.random.normal(k_hx, (1, hidden_dim), dtype=jnp.float32)

    params = init_params(k_params, state_dim, action_dim, hidden_dim)
    q_gold, hx_gold = critic_forward_ref(state, action, hx, params)

    # --- f32 weight slab: tight tolerance -----------------------------------
    w_f32 = pack_params(params, state_dim, action_dim, hidden_dim,
                        dtype=jnp.float32)
    q, hx_updated = critic_forward(
        state, action, hx, w_f32,
        state_dim=state_dim, action_dim=action_dim, hidden_dim=hidden_dim)
    jax.block_until_ready((q, hx_updated))
    assert q.shape == (batch, 1) and hx_updated.shape == (batch, hidden_dim)
    assert jnp.allclose(q, q_gold, atol=2e-5, rtol=2e-5)
    assert jnp.allclose(hx_updated, hx_gold, atol=2e-5, rtol=2e-5)

    # --- bf16 weight slab: half the parameter DMA, loose tolerance ----------
    w_bf16 = pack_params(params, state_dim, action_dim, hidden_dim,
                         dtype=jnp.bfloat16)
    q16, hx16 = critic_forward(
        state, action, hx, w_bf16,
        state_dim=state_dim, action_dim=action_dim, hidden_dim=hidden_dim)
    jax.block_until_ready((q16, hx16))
    assert jnp.allclose(q16, q_gold, atol=5e-2, rtol=5e-2)
    assert jnp.allclose(hx16, hx_gold, atol=5e-2, rtol=5e-2)

    print("KERNEL_OK")
</pallas_src>

<mosaic_0001>
module attributes {stable_mosaic.version = 11 : i64} {
  func.func @_critic_kernel(%arg0: memref<4x16xf32, #tpu.memory_space<vmem>>, %arg1: memref<1x32xf32, #tpu.memory_space<vmem>>, %arg2: memref<116x128xf32, #tpu.memory_space<vmem>>, %arg3: memref<4x1xf32, #tpu.memory_space<vmem>>, %arg4: memref<4x32xf32, #tpu.memory_space<vmem>>) attributes {dimension_semantics = [], scalar_prefetch = 0 : i64, scratch_operands = 0 : i64, tpu.core_type = #tpu.core_type<tc>} {
    %c0 = arith.constant 0 : index
    %c0_0 = arith.constant 0 : index
    %0 = vector.load %arg2[%c0, %c0_0] : memref<116x128xf32, #tpu.memory_space<vmem>>, vector<16x32xf32>
    %c16 = arith.constant 16 : index
    %c0_1 = arith.constant 0 : index
    %1 = vector.load %arg2[%c16, %c0_1] : memref<116x128xf32, #tpu.memory_space<vmem>>, vector<64x128xf32>
    %c80 = arith.constant 80 : index
    %c0_2 = arith.constant 0 : index
    %2 = vector.load %arg2[%c80, %c0_2] : memref<116x128xf32, #tpu.memory_space<vmem>>, vector<32x32xf32>
    %c112 = arith.constant 112 : index
    %c0_3 = arith.constant 0 : index
    %3 = vector.load %arg2[%c112, %c0_3] : memref<116x128xf32, #tpu.memory_space<vmem>>, vector<1x32xf32>
    %c113 = arith.constant 113 : index
    %c0_4 = arith.constant 0 : index
    %4 = vector.load %arg2[%c113, %c0_4] : memref<116x128xf32, #tpu.memory_space<vmem>>, vector<1x32xf32>
    %c114 = arith.constant 114 : index
    %c0_5 = arith.constant 0 : index
    %5 = vector.load %arg2[%c114, %c0_5] : memref<116x128xf32, #tpu.memory_space<vmem>>, vector<1x128xf32>
    %c115 = arith.constant 115 : index
    %c0_6 = arith.constant 0 : index
    %6 = vector.load %arg2[%c115, %c0_6] : memref<116x128xf32, #tpu.memory_space<vmem>>, vector<1x32xf32>
    %c115_7 = arith.constant 115 : index
    %c32 = arith.constant 32 : index
    %7 = vector.load %arg2[%c115_7, %c32] : memref<116x128xf32, #tpu.memory_space<vmem>>, vector<1x1xf32>
    %c0_8 = arith.constant 0 : index
    %c0_9 = arith.constant 0 : index
    %8 = vector.load %arg0[%c0_8, %c0_9] : memref<4x16xf32, #tpu.memory_space<vmem>>, vector<4x16xf32>
    %c0_10 = arith.constant 0 : index
    %c0_11 = arith.constant 0 : index
    %9 = vector.load %arg1[%c0_10, %c0_11] : memref<1x32xf32, #tpu.memory_space<vmem>>, vector<1x32xf32>
    %cst = arith.constant dense<0.000000e+00> : vector<4x32xf32>
    %10 = tpu.matmul %8, %0, %cst {dimension_numbers = #tpu.dot_dimension_numbers<[1], [0], [0], [1], [0, 0, 1, 1], [], []>} : vector<4x16xf32>, vector<16x32xf32>, vector<4x32xf32> -> vector<4x32xf32>
    %11 = vector.broadcast %4 : vector<1x32xf32> to vector<4x32xf32>
    %12 = arith.addf %10, %11 : vector<4x32xf32>
    %cst_12 = arith.constant 0.000000e+00 : f32
    %13 = vector.broadcast %cst_12 : f32 to vector<4x32xf32>
    %14 = arith.maximumf %12, %13 : vector<4x32xf32>
    %15 = vector.shape_cast %9 : vector<1x32xf32> to vector<1x32xf32>
    %16 = vector.broadcast %15 : vector<1x32xf32> to vector<4x32xf32>
    %17 = tpu.concatenate %14, %16 in 1 : vector<4x32xf32>, vector<4x32xf32> -> vector<4x64xf32>
    %cst_13 = arith.constant dense<0.000000e+00> : vector<4x128xf32>
    %18 = tpu.matmul %17, %1, %cst_13 {dimension_numbers = #tpu.dot_dimension_numbers<[1], [0], [0], [1], [0, 0, 1, 1], [], []>} : vector<4x64xf32>, vector<64x128xf32>, vector<4x128xf32> -> vector<4x128xf32>
    %19 = vector.broadcast %5 : vector<1x128xf32> to vector<4x128xf32>
    %20 = arith.addf %18, %19 : vector<4x128xf32>
    %21 = vector.extract_strided_slice %20 {offsets = [0, 0], sizes = [4, 32], strides = [1, 1]} : vector<4x128xf32> to vector<4x32xf32>
    %22 = arith.negf %21 : vector<4x32xf32>
    %23 = math.exp %22 : vector<4x32xf32>
    %cst_14 = arith.constant 1.000000e+00 : f32
    %24 = vector.broadcast %cst_14 : f32 to vector<4x32xf32>
    %25 = arith.addf %24, %23 : vector<4x32xf32>
    %26 = arith.divf %24, %25 : vector<4x32xf32>
    %27 = vector.extract_strided_slice %20 {offsets = [0, 32], sizes = [4, 32], strides = [1, 1]} : vector<4x128xf32> to vector<4x32xf32>
    %28 = arith.negf %27 : vector<4x32xf32>
    %29 = math.exp %28 : vector<4x32xf32>
    %cst_15 = arith.constant 1.000000e+00 : f32
    %30 = vector.broadcast %cst_15 : f32 to vector<4x32xf32>
    %31 = arith.addf %30, %29 : vector<4x32xf32>
    %32 = arith.divf %30, %31 : vector<4x32xf32>
    %33 = vector.extract_strided_slice %20 {offsets = [0, 64], sizes = [4, 32], strides = [1, 1]} : vector<4x128xf32> to vector<4x32xf32>
    %34 = vector.extract_strided_slice %20 {offsets = [0, 96], sizes = [4, 32], strides = [1, 1]} : vector<4x128xf32> to vector<4x32xf32>
    %35 = arith.mulf %26, %34 : vector<4x32xf32>
    %36 = arith.addf %33, %35 : vector<4x32xf32>
    %37 = math.tanh %36 : vector<4x32xf32>
    %cst_16 = arith.constant 1.000000e+00 : f32
    %38 = vector.broadcast %cst_16 : f32 to vector<4x32xf32>
    %39 = arith.subf %38, %32 : vector<4x32xf32>
    %40 = arith.mulf %39, %37 : vector<4x32xf32>
    %41 = vector.broadcast %9 : vector<1x32xf32> to vector<4x32xf32>
    %42 = arith.mulf %32, %41 : vector<4x32xf32>
    %43 = arith.addf %40, %42 : vector<4x32xf32>
    %cst_17 = arith.constant dense<0.000000e+00> : vector<4x32xf32>
    %44 = tpu.matmul %43, %2, %cst_17 {dimension_numbers = #tpu.dot_dimension_numbers<[1], [0], [0], [1], [0, 0, 1, 1], [], []>} : vector<4x32xf32>, vector<32x32xf32>, vector<4x32xf32> -> vector<4x32xf32>
    %45 = vector.broadcast %6 : vector<1x32xf32> to vector<4x32xf32>
    %46 = arith.addf %44, %45 : vector<4x32xf32>
    %cst_18 = arith.constant 0.000000e+00 : f32
    %47 = vector.broadcast %cst_18 : f32 to vector<4x32xf32>
    %48 = arith.maximumf %46, %47 : vector<4x32xf32>
    %49 = vector.broadcast %3 : vector<1x32xf32> to vector<4x32xf32>
    %50 = arith.mulf %48, %49 : vector<4x32xf32>
    %cst_19 = arith.constant dense<0.000000e+00> : vector<4xf32>
    %51 = vector.multi_reduction <add>, %50, %cst_19 [1] : vector<4x32xf32> to vector<4xf32>
    %52 = vector.shape_cast %51 : vector<4xf32> to vector<4x1xf32>
    %53 = vector.broadcast %7 : vector<1x1xf32> to vector<4x1xf32>
    %54 = arith.addf %52, %53 : vector<4x1xf32>
    %c0_20 = arith.constant 0 : index
    %c0_21 = arith.constant 0 : index
    %55 = vector.load %arg3[%c0_20, %c0_21] : memref<4x1xf32, #tpu.memory_space<vmem>>, vector<4x1xf32>
    tpu.vector_store %arg3[%c0_20, %c0_21], %54 {strides = array<i32>} : memref<4x1xf32, #tpu.memory_space<vmem>>, vector<4x1xf32>,
    %c0_22 = arith.constant 0 : index
    %c0_23 = arith.constant 0 : index
    %56 = vector.load %arg4[%c0_22, %c0_23] : memref<4x32xf32, #tpu.memory_space<vmem>>, vector<4x32xf32>
    tpu.vector_store %arg4[%c0_22, %c0_23], %43 {strides = array<i32>} : memref<4x32xf32, #tpu.memory_space<vmem>>, vector<4x32xf32>,
    return
  }
}

</mosaic_0001>

<llo_original>
// kernel: tpu_custom_call.1
$region0: #{tpu_custom_call.1}
  #allocation0 [shape = 'u32[]', space=smem, size = 0x4, offset = 0x4, fixed_abs, tag = 'smem constant byte address 0x4 - core index']
  #allocation1 [shape = 'u32[144,128]{1,0:T(1,128)}', space=vmem, size = 0x12000, scoped, tag = 'internal scratch']
  %s0 = inlined_call_operand.hbm [shape: f32[4,16], index: 0, kind: input, shape index: {}]
  %s1 = inlined_call_operand.vmem [shape: f32[1,32], index: 1, kind: input, shape index: {}]
  %s2 = inlined_call_operand.hbm [shape: f32[116,128], index: 2, kind: input, shape index: {}]
  %s3 = inlined_call_operand.vmem [shape: f32[4,1], index: 3, kind: output, shape index: {0}]
  %s4 = inlined_call_operand.hbm [shape: f32[4,32], index: 4, kind: output, shape index: {1}]
  %5 = xla_tuple %s3, %s4
  %s6 = sld [smem:[#allocation0]]
  $region38: #{tpu_custom_call.1} parent=0
    _
  %s8 = ssub.s32 1, %s6
  %s9 = scalar_select 0, %s8, %s6
  $region1: #{tpu_custom_call.1} parent=0
    #allocation2 [shape = 'u8[2048]{0}', space=vmem, size = 0x800, scoped, tag = 'input window, operand 0, single buffered']
    #allocation3 [shape = 's32[1]{0}', space=sflag, size = 0x4, scoped, tag = 'scoped memory for tpu_custom_call.1']
    #allocation4 [shape = 's32[1]{0}', space=sflag, size = 0x4, scoped, tag = 'scoped memory for tpu_custom_call.1']
    #allocation5 [shape = 'u8[61440]{0}', space=vmem, size = 0xf000, scoped, tag = 'input window, operand 2, single buffered']
    #allocation6 [shape = 's32[1]{0}', space=sflag, size = 0x4, scoped, tag = 'scoped memory for tpu_custom_call.1']
    #allocation7 [shape = 'u8[2048]{0}', space=vmem, size = 0x800, scoped, tag = 'output window, operand 1, single buffered']
    %10 = vsyncpa [#allocation3], 0
    %11 = vsyncpa [#allocation6], 0
    %12 = vsyncpa [#allocation4], 0
    // Predicated region
    $region2: #{tpu_custom_call.1} parent=1 // pred_check
      _
    $region3: #{tpu_custom_call.1} parent=1 // pred_check_branch
      %14 = sbr.rel (0) target = $region5
    $region4: #{tpu_custom_call.1} parent=1 // pred_region
      %s16 = ssub.s32 64, 64
      %17 = vsyncadd [#allocation3], %s16
      %s19 = sshll.u32 [#allocation2], 4
      %s20 = int_to_ptr.vmem [resolvable:$true] %s19
      %22 = dma.hbm_to_vmem [thread:$0]  %s0, 64, %s20, [#allocation3]
    $region5: #{tpu_custom_call.1} parent=1 // pred_fallthru
      _
    // Predicated region
    $region6: #{tpu_custom_call.1} parent=1 // pred_check
      _
    $region7: #{tpu_custom_call.1} parent=1 // pred_check_branch
      %24 = sbr.rel (0) target = $region9
    $region8: #{tpu_custom_call.1} parent=1 // pred_region
      _
    $region9: #{tpu_custom_call.1} parent=1 // pred_fallthru
      _
    // Predicated region
    $region10: #{tpu_custom_call.1} parent=1 // pred_check
      _
    $region11: #{tpu_custom_call.1} parent=1 // pred_check_branch
      %26 = sbr.rel (0) target = $region13
    $region12: #{tpu_custom_call.1} parent=1 // pred_region
      %s28 = ssub.s32 1920, 1920
      %29 = vsyncadd [#allocation6], %s28
      %s30 = sshll.u32 [#allocation5], 4
      %s31 = int_to_ptr.vmem [resolvable:$true] %s30
      %36 = dma.hbm_to_vmem [thread:$0]  %s2, 1920, %s31, [#allocation6], 128, 128, 8
    $region13: #{tpu_custom_call.1} parent=1 // pred_fallthru
      _
    // Predicated region
    $region14: #{tpu_custom_call.1} parent=1 // pred_check
      _
    $region15: #{tpu_custom_call.1} parent=1 // pred_check_branch
      %38 = sbr.rel (0) target = $region17
    $region16: #{tpu_custom_call.1} parent=1 // pred_region
      %39 = dma.done [#allocation3], 64
    $region17: #{tpu_custom_call.1} parent=1 // pred_fallthru
      _
    // Predicated region
    $region18: #{tpu_custom_call.1} parent=1 // pred_check
      _
    $region19: #{tpu_custom_call.1} parent=1 // pred_check_branch
      %41 = sbr.rel (0) target = $region21
    $region20: #{tpu_custom_call.1} parent=1 // pred_region
      %42 = dma.done [#allocation6], 1920
    $region21: #{tpu_custom_call.1} parent=1 // pred_fallthru
      _
    %v43 = vld [vmem:[#allocation5] sm:$0xff]
    %v44 = vld [vmem:[#allocation5 + $0x8] sm:$0xff]
    %v45 = vld [vmem:[#allocation5 + $0x10] sm:$0xff]
    %v46 = vld [vmem:[#allocation5 + $0x18] sm:$0xff]
    %v47 = vld [vmem:[#allocation5 + $0x20] sm:$0xff]
    %v48 = vld [vmem:[#allocation5 + $0x28] sm:$0xff]
    %v49 = vld [vmem:[#allocation5 + $0x30] sm:$0xff]
    %v50 = vld [vmem:[#allocation5 + $0x38] sm:$0xff]
    %v51 = vld [vmem:[#allocation5 + $0x40] sm:$0xff]
    %v52 = vld [vmem:[#allocation5 + $0x48] sm:$0xff]
    %v53 = vld [vmem:[#allocation5 + $0x50] sm:$0xff]
    %v54 = vld [vmem:[#allocation5 + $0x58] sm:$0xff]
    %v55 = vld [vmem:[#allocation5 + $0x60] sm:$0xff]
    %v56 = vld [vmem:[#allocation5 + $0x68] sm:$0xff]
    %v57 = vld [vmem:[#allocation5 + $0x70] sm:$0x1]
    %v58 = vld [vmem:[#allocation5 + $0x71] sm:$0x1]
    %v59 = vld [vmem:[#allocation5 + $0x72] sm:$0x1]
    %v60 = vld [vmem:[#allocation5 + $0x73] sm:$0x1]
    %v61 = vld [vmem:[#allocation2] sm:$0xf]
    %v62 = vld [vmem:[%s1] sm:$0x1]
    %v63 = vlaneseq
    %v64 = vshrl.u32 %v63, 7
    %v65 = vsub.s32 0, %v64
    %v66 = vrot.slane %v58, %v65
    %vm67 = vcmask 130048
    %v69 = vsel %vm67, %v61, 0
    %71 = vmatprep.subr.mxu0 0.0
    %72 = vmatpush1.msra.mxu0 %v43
    %73 = vmatprep.subr.mxu0 0.0
    %74 = vmatpush1.msra.mxu0 %v44
    %75 = vmatprep.subr.mxu0 0.0
    %76 = vmatpush1.msra.mxu0 0.0
    %77 = vmatprep.subr.mxu0 0.0
    %78 = vmatpush1.msra.mxu0 0.0
    %79 = vmatprep.subr.mxu0 0.0
    %80 = vmatpush1.msra.mxu0 0.0
    %81 = vmatprep.subr.mxu0 0.0
    %82 = vmatpush1.msra.mxu0 0.0
    %83 = vmatprep.subr.mxu0 0.0
    %84 = vmatpush1.msra.mxu0 0.0
    %85 = vmatprep.subr.mxu0 0.0
    %86 = vmatpush1.msra.mxu0 0.0
    %87 = vmatprep.subr.mxu0 0.0
    %88 = vmatpush1.msra.mxu0 0.0
    %89 = vmatprep.subr.mxu0 0.0
    %90 = vmatpush1.msra.mxu0 0.0
    %91 = vmatprep.subr.mxu0 0.0
    %92 = vmatpush1.msra.mxu0 0.0
    %93 = vmatprep.subr.mxu0 0.0
    %94 = vmatpush1.msra.mxu0 0.0
    %95 = vmatprep.subr.mxu0 0.0
    %96 = vmatpush1.msra.mxu0 0.0
    %97 = vmatprep.subr.mxu0 0.0
    %98 = vmatpush1.msra.mxu0 0.0
    %99 = vmatprep.subr.mxu0 0.0
    %100 = vmatpush1.msra.mxu0 0.0
    %101 = vmatprep.subr.mxu0 0.0
    %102 = vmatpush1.msra.mxu0 0.0
    %103 = vmatprep.subr.mxu0 0.0
    %104 = vmatpush1.msra.mxu0 0.0
    %105 = vmatprep.subr.mxu0 0.0
    %106 = vmatpush1.msra.mxu0 0.0
    %107 = vmatprep.subr.mxu0 0.0
    %108 = vmatpush1.msra.mxu0 0.0
    %109 = vmatprep.subr.mxu0 0.0
    %110 = vmatpush1.msra.mxu0 0.0
    %111 = vmatprep.subr.mxu0 0.0
    %112 = vmatpush1.msra.mxu0 0.0
    %113 = vmatprep.subr.mxu0 0.0
    %114 = vmatpush1.msra.mxu0 0.0
    %115 = vmatprep.subr.mxu0 0.0
    %116 = vmatpush1.msra.mxu0 0.0
    %117 = vmatprep.subr.mxu0 0.0
    %118 = vmatpush1.msra.mxu0 0.0
    %119 = vmatprep.subr.mxu0 0.0
    %120 = vmatpush1.msra.mxu0 0.0
    %121 = vmatprep.subr.mxu0 0.0
    %122 = vmatpush1.msra.mxu0 0.0
    %123 = vmatprep.subr.mxu0 0.0
    %124 = vmatpush1.msra.mxu0 0.0
    %125 = vmatprep.subr.mxu0 0.0
    %126 = vmatpush1.msra.mxu0 0.0
    %127 = vmatprep.subr.mxu0 0.0
    %128 = vmatpush1.msra.mxu0 0.0
    %129 = vmatprep.subr.mxu0 0.0
    %130 = vmatpush1.msra.mxu0 0.0
    %131 = vmatprep.subr.mxu0 0.0
    %132 = vmatpush1.msra.mxu0 0.0
    %133 = vmatprep.subr.mxu0 0.0
    %134 = vmatpush1.msra.mxu0 0.0
    %135 = vmatprep.mubr.f32.mxu0 0.0
    %136 = vmatmul.mubr.f32.gmra.mrb[0].mxu0 %v69
    %v137 = vpop.f32.mrb[0].mxu0
    %v138 = vadd.f32 %v66, %v137
    %v139 = vpop.f32.mrb[0].mxu0
    %140 = vdwg.mxu0
    %v141 = vmax.f32 %v138, 0.0
    %v143 = vlaneseq
    %v144 = vshrl.u32 %v143, 7
    %v145 = vsub.s32 0, %v144
    %v146 = vrot.slane %v62, %v145
    %147 = vrot.lane.b32.xlu0 %v146, 32
    %v148 = vpop.permute.xlu0 %147
    %vm150 = vcmask 261120
    %v151 = vsel %vm150, %v141, %v148
    %v152 = vlaneseq
    %v153 = vshrl.u32 %v152, 7
    %v154 = vsub.s32 0, %v153
    %v155 = vrot.slane %v59, %v154
    %vm156 = vcmask 523264
    %v158 = vsel %vm156, %v151, 0
    %160 = vmatprep.subr.mxu0 0.0
    %161 = vmatpush1.msra.mxu0 %v45
    %162 = vmatprep.subr.mxu0 0.0
    %163 = vmatpush1.msra.mxu0 %v46
    %164 = vmatprep.subr.mxu0 0.0
    %165 = vmatpush1.msra.mxu0 %v47
    %166 = vmatprep.subr.mxu0 0.0
    %167 = vmatpush1.msra.mxu0 %v48
    %168 = vmatprep.subr.mxu0 0.0
    %169 = vmatpush1.msra.mxu0 %v49
    %170 = vmatprep.subr.mxu0 0.0
    %171 = vmatpush1.msra.mxu0 %v50
    %172 = vmatprep.subr.mxu0 0.0
    %173 = vmatpush1.msra.mxu0 %v51
    %174 = vmatprep.subr.mxu0 0.0
    %175 = vmatpush1.msra.mxu0 %v52
    %176 = vmatprep.subr.mxu0 0.0
    %177 = vmatpush1.msra.mxu0 0.0
    %178 = vmatprep.subr.mxu0 0.0
    %179 = vmatpush1.msra.mxu0 0.0
    %180 = vmatprep.subr.mxu0 0.0
    %181 = vmatpush1.msra.mxu0 0.0
    %182 = vmatprep.subr.mxu0 0.0
    %183 = vmatpush1.msra.mxu0 0.0
    %184 = vmatprep.subr.mxu0 0.0
    %185 = vmatpush1.msra.mxu0 0.0
    %186 = vmatprep.subr.mxu0 0.0
    %187 = vmatpush1.msra.mxu0 0.0
    %188 = vmatprep.subr.mxu0 0.0
    %189 = vmatpush1.msra.mxu0 0.0
    %190 = vmatprep.subr.mxu0 0.0
    %191 = vmatpush1.msra.mxu0 0.0
    %192 = vmatprep.subr.mxu0 0.0
    %193 = vmatpush1.msra.mxu0 0.0
    %194 = vmatprep.subr.mxu0 0.0
    %195 = vmatpush1.msra.mxu0 0.0
    %196 = vmatprep.subr.mxu0 0.0
    %197 = vmatpush1.msra.mxu0 0.0
    %198 = vmatprep.subr.mxu0 0.0
    %199 = vmatpush1.msra.mxu0 0.0
    %200 = vmatprep.subr.mxu0 0.0
    %201 = vmatpush1.msra.mxu0 0.0
    %202 = vmatprep.subr.mxu0 0.0
    %203 = vmatpush1.msra.mxu0 0.0
    %204 = vmatprep.subr.mxu0 0.0
    %205 = vmatpush1.msra.mxu0 0.0
    %206 = vmatprep.subr.mxu0 0.0
    %207 = vmatpush1.msra.mxu0 0.0
    %208 = vmatprep.subr.mxu0 0.0
    %209 = vmatpush1.msra.mxu0 0.0
    %210 = vmatprep.subr.mxu0 0.0
    %211 = vmatpush1.msra.mxu0 0.0
    %212 = vmatprep.subr.mxu0 0.0
    %213 = vmatpush1.msra.mxu0 0.0
    %214 = vmatprep.subr.mxu0 0.0
    %215 = vmatpush1.msra.mxu0 0.0
    %216 = vmatprep.subr.mxu0 0.0
    %217 = vmatpush1.msra.mxu0 0.0
    %218 = vmatprep.subr.mxu0 0.0
    %219 = vmatpush1.msra.mxu0 0.0
    %220 = vmatprep.subr.mxu0 0.0
    %221 = vmatpush1.msra.mxu0 0.0
    %222 = vmatprep.subr.mxu0 0.0
    %223 = vmatpush1.msra.mxu0 0.0
    %224 = vmatprep.mubr.f32.mxu0 0.0
    %225 = vmatmul.mubr.f32.gmra.mrb[0].mxu0 %v158
    %v226 = vpop.f32.mrb[0].mxu0
    %v227 = vadd.f32 %v155, %v226
    %v228 = vpop.f32.mrb[0].mxu0
    %229 = vdwg.mxu0
    %v230 = vxor.u32 %v227, 2147483648
    %v231 = vmul.f32 %v230, 1.442695
    %v232 = vpow.pop %v231
    %v233 = vadd.f32 %v232, 1.0
    %v234 = vrcp.pop %v233
    %v235 = vmul.f32 1.0, %v234
    %237 = vrot.lane.b32.xlu0 %v227, 32
    %v238 = vpop.permute.xlu0 %237
    %v240 = vmul.f32 %v235, %v238
    %242 = vrot.lane.b32.xlu0 %v240, 64
    %v243 = vpop.permute.xlu0 %242
    %v245 = vadd.f32 %v227, %v243
    %v246 = vtanh.pop %v245
    %v247 = vsub.f32 1.0, %v235
    %249 = vrot.lane.b32.xlu0 %v246, 96
    %v250 = vpop.permute.xlu0 %249
    %v252 = vmul.f32 %v247, %v250
    %v253 = vmul.f32 %v235, %v148
    %v254 = vadd.f32 %v252, %v253
    %v255 = vlaneseq
    %v256 = vshrl.u32 %v255, 7
    %v257 = vsub.s32 0, %v256
    %v258 = vrot.slane %v60, %v257
    %260 = vrot.lane.b32.xlu0 %v254, 96
    %v261 = vpop.permute.xlu0 %260
    %v262 = vsel %vm150, %v261, 0
    %264 = vmatprep.subr.mxu0 0.0
    %265 = vmatpush1.msra.mxu0 %v53
    %266 = vmatprep.subr.mxu0 0.0
    %267 = vmatpush1.msra.mxu0 %v54
    %268 = vmatprep.subr.mxu0 0.0
    %269 = vmatpush1.msra.mxu0 %v55
    %270 = vmatprep.subr.mxu0 0.0
    %271 = vmatpush1.msra.mxu0 %v56
    %272 = vmatprep.subr.mxu0 0.0
    %273 = vmatpush1.msra.mxu0 0.0
    %274 = vmatprep.subr.mxu0 0.0
    %275 = vmatpush1.msra.mxu0 0.0
    %276 = vmatprep.subr.mxu0 0.0
    %277 = vmatpush1.msra.mxu0 0.0
    %278 = vmatprep.subr.mxu0 0.0
    %279 = vmatpush1.msra.mxu0 0.0
    %280 = vmatprep.subr.mxu0 0.0
    %281 = vmatpush1.msra.mxu0 0.0
    %282 = vmatprep.subr.mxu0 0.0
    %283 = vmatpush1.msra.mxu0 0.0
    %284 = vmatprep.subr.mxu0 0.0
    %285 = vmatpush1.msra.mxu0 0.0
    %286 = vmatprep.subr.mxu0 0.0
    %287 = vmatpush1.msra.mxu0 0.0
    %288 = vmatprep.subr.mxu0 0.0
    %289 = vmatpush1.msra.mxu0 0.0
    %290 = vmatprep.subr.mxu0 0.0
    %291 = vmatpush1.msra.mxu0 0.0
    %292 = vmatprep.subr.mxu0 0.0
    %293 = vmatpush1.msra.mxu0 0.0
    %294 = vmatprep.subr.mxu0 0.0
    %295 = vmatpush1.msra.mxu0 0.0
    %296 = vmatprep.subr.mxu0 0.0
    %297 = vmatpush1.msra.mxu0 0.0
    %298 = vmatprep.subr.mxu0 0.0
    %299 = vmatpush1.msra.mxu0 0.0
    %300 = vmatprep.subr.mxu0 0.0
    %301 = vmatpush1.msra.mxu0 0.0
    %302 = vmatprep.subr.mxu0 0.0
    %303 = vmatpush1.msra.mxu0 0.0
    %304 = vmatprep.subr.mxu0 0.0
    %305 = vmatpush1.msra.mxu0 0.0
    %306 = vmatprep.subr.mxu0 0.0
    %307 = vmatpush1.msra.mxu0 0.0
    %308 = vmatprep.subr.mxu0 0.0
    %309 = vmatpush1.msra.mxu0 0.0
    %310 = vmatprep.subr.mxu0 0.0
    %311 = vmatpush1.msra.mxu0 0.0
    %312 = vmatprep.subr.mxu0 0.0
    %313 = vmatpush1.msra.mxu0 0.0
    %314 = vmatprep.subr.mxu0 0.0
    %315 = vmatpush1.msra.mxu0 0.0
    %316 = vmatprep.subr.mxu0 0.0
    %317 = vmatpush1.msra.mxu0 0.0
    %318 = vmatprep.subr.mxu0 0.0
    %319 = vmatpush1.msra.mxu0 0.0
    %320 = vmatprep.subr.mxu0 0.0
    %321 = vmatpush1.msra.mxu0 0.0
    %322 = vmatprep.subr.mxu0 0.0
    %323 = vmatpush1.msra.mxu0 0.0
    %324 = vmatprep.subr.mxu0 0.0
    %325 = vmatpush1.msra.mxu0 0.0
    %326 = vmatprep.subr.mxu0 0.0
    %327 = vmatpush1.msra.mxu0 0.0
    %328 = vmatprep.mubr.f32.mxu0 0.0
    %329 = vmatmul.mubr.f32.gmra.mrb[0].mxu0 %v262
    %v330 = vpop.f32.mrb[0].mxu0
    %v331 = vadd.f32 %v258, %v330
    %v332 = vpop.f32.mrb[0].mxu0
    %333 = vdwg.mxu0
    %v334 = vmax.f32 %v331, 0.0
    %v335 = vlaneseq
    %v336 = vshrl.u32 %v335, 7
    %v337 = vsub.s32 0, %v336
    %v338 = vrot.slane %v57, %v337
    %v339 = vmul.f32 %v334, %v338
    %vm340 = vcmask 257024
    %v341 = vsel %vm340, %v339, 0.0
    %342 = vadd.xlane.f32.xlu0 %v341
    %v343 = vpop.xlane.xlu0 %342
    %v344 = vadd.f32 %v343, %v258
    %346 = vrot.lane.b32.xlu0 %v344, 96
    %v347 = vpop.permute.xlu0 %346
    %vm349 = vcmask 3072
    %350 = vst.msk [vmem:[%s3] sm:$0xf] %vm349, %v347
    %352 = vst.msk [vmem:[#allocation7] sm:$0xf] %vm340, %v261
    // Predicated region
    $region22: #{tpu_custom_call.1} parent=1 // pred_check
      _
    $region23: #{tpu_custom_call.1} parent=1 // pred_check_branch
      %354 = sbr.rel (0) target = $region25
    $region24: #{tpu_custom_call.1} parent=1 // pred_region
      _
    $region25: #{tpu_custom_call.1} parent=1 // pred_fallthru
      _
    // Predicated region
    $region26: #{tpu_custom_call.1} parent=1 // pred_check
      _
    $region27: #{tpu_custom_call.1} parent=1 // pred_check_branch
      %356 = sbr.rel (0) target = $region29
    $region28: #{tpu_custom_call.1} parent=1 // pred_region
      %s358 = ssub.s32 64, 64
      %359 = vsyncadd [#allocation4], %s358
      %s361 = sshll.u32 [#allocation7], 4
      %s362 = int_to_ptr.vmem [resolvable:$true] %s361
      %364 = dma.vmem_to_hbm [thread:$0]  %s362, 64, %s4, [#allocation4]
    $region29: #{tpu_custom_call.1} parent=1 // pred_fallthru
      _
    // Predicated region
    $region30: #{tpu_custom_call.1} parent=1 // pred_check
      _
    $region31: #{tpu_custom_call.1} parent=1 // pred_check_branch
      %366 = sbr.rel (0) target = $region33
    $region32: #{tpu_custom_call.1} parent=1 // pred_region
      _
    $region33: #{tpu_custom_call.1} parent=1 // pred_fallthru
      _
    // Predicated region
    $region34: #{tpu_custom_call.1} parent=1 // pred_check
      _
    $region35: #{tpu_custom_call.1} parent=1 // pred_check_branch
      %368 = sbr.rel (0) target = $region37
    $region36: #{tpu_custom_call.1} parent=1 // pred_region
      %369 = dma.done [#allocation4], 64
    $region37: #{tpu_custom_call.1} parent=1 // pred_fallthru
      _
    %370 = vsyncpa [#allocation3], 1
    %371 = vsyncpa [#allocation6], 1
    %372 = vsyncpa [#allocation4], 1

</llo_original>
